<compile_context>
chip_gen: v5e
topology: v5e:2x2
jax: 0.10.0
libtpu: 0.0.40
codegen_flags: <defaults>
</compile_context>

<pallas_src>
import jax
import jax.numpy as jnp
from jax.experimental import pallas as pl
from jax.experimental.pallas import tpu as pltpu

KH, KW = 3, 3  # conv kernel size (padding=1, stride=1 -> "same")


def _fused_conv_relu_kernel(img_ref, msk_ref, bw_ref, bias_ref, o_ref,
                            xpad_ref, lhs_ref):
    """Gridless kernel: fused concat + zero-pad + conv3x3 + bias + ReLU.

    img_ref : (N, C_img, H, W)          image, NCHW (as handed to the module)
    msk_ref : (N, C_msk, H, W)          mask, NCHW
    bw_ref  : (KH*Cin*W, Cout*W)        cached banded conv weights
    bias_ref: (1, Cout*W)               bias, pre-broadcast along the lane axis
    o_ref   : (N*H, Cout*W)             lane-dense output slab
    xpad_ref: (N, H+2, Cin*W)  VMEM     H-padded, channel-packed activations
    lhs_ref : (N, H, KH*Cin*W) VMEM     stacked shifted views (im2col along H)
    """
    n, c_img, h, w = img_ref.shape
    c_msk = msk_ref.shape[1]
    cin = c_img + c_msk
    cinw = cin * w
    kh_taps = bw_ref.shape[0] // cinw
    ncols = o_ref.shape[1]

    # ---- zero the padded slab once (supplies the "same" padding along H) ----
    xpad_ref[...] = jnp.zeros_like(xpad_ref)

    # ---- fused channel concat via stores: lanes = (ci, w), rows = (n, h) ----
    img = img_ref[...]
    msk = msk_ref[...]
    for c in range(c_img):
        xpad_ref[:, 1:h + 1, c * w:(c + 1) * w] = img[:, c]
    for c in range(c_msk):
        xpad_ref[:, 1:h + 1, (c_img + c) * w:(c_img + c + 1) * w] = msk[:, c]

    # ---- stack the KH row-shifted views -> single (N*H, KH*Cin*W) lhs ----
    for kh in range(kh_taps):
        lhs_ref[:, :, kh * cinw:(kh + 1) * cinw] = xpad_ref[:, kh:kh + h, :]

    # ---- one MXU matmul: (32, 192) @ (192, 128), f32 accumulation ----
    lhs = lhs_ref[...].reshape(n * h, kh_taps * cinw)
    acc = jnp.dot(lhs, bw_ref[...], preferred_element_type=jnp.float32)
    acc = acc + bias_ref[...]

    # Cout*W == 128 here -> exactly one vreg wide, unmasked dense store.
    o_ref[...] = jnp.maximum(acc, 0.0)


def prepare_encoder_params(weight, bias, W):
    """Build the banded conv weight + lane-broadcast bias ONCE (cache & reuse).

    weight: (Cout, Cin, KH, KW) PyTorch Conv2d layout, bias: (Cout,).
    Returns bw (KH*Cin*W, Cout*W) and bias_lane (1, Cout*W).
    """
    Cout, Cin, kh_, kw_ = weight.shape
    # Banded-weight footprint grows O(W^2); guard before it threatens VMEM
    # (v7x has only 64 MiB physical / 32 MiB default scoped VMEM).
    band_bytes = kh_ * Cin * W * Cout * W * 4
    assert band_bytes <= 8 * 1024 * 1024, (
        "banded conv weight too large for VMEM-resident formulation; "
        "switch to an im2col/pltpu.roll path for wide images")

    w32 = weight.astype(jnp.float32)
    # bw[(kh, ci, wi), (co, wo)] = weight[co, ci, kh, wi - wo + KW//2] when the
    # tap is in range; absent taps reproduce Conv2d's zero padding along W.
    wi = jnp.arange(W)[None, :, None]
    wo = jnp.arange(W)[None, None, :]
    kw = jnp.arange(kw_)[:, None, None]
    shift = (wi == wo + kw - (kw_ // 2)).astype(jnp.float32)   # (KW, W, W)
    bw = jnp.einsum('oihk,kjw->hijow', w32, shift)             # (KH,Cin,W,Cout,W)
    bw = bw.reshape(kh_ * Cin * W, Cout * W)                   # (192, 128)

    bias_lane = jnp.repeat(bias.astype(jnp.float32), W).reshape(1, Cout * W)
    return bw, bias_lane


@jax.jit
def basic_encoder_forward(image, mask, bw, bias_lane):
    """image: (N, C_img, H, W), mask: (N, C_msk, H, W)  (NCHW, like PyTorch).
    bw / bias_lane: precomputed by prepare_encoder_params (cached across calls).
    Returns (N, Cout, H, W)."""
    N, C_img, H, W = image.shape
    C_msk = mask.shape[1]
    Cin = C_img + C_msk
    CoutW = bw.shape[1]
    Cout = CoutW // W

    image = image.astype(jnp.float32)
    mask = mask.astype(jnp.float32)

    vmem = pltpu.MemorySpace.VMEM
    out_flat = pl.pallas_call(
        _fused_conv_relu_kernel,
        out_shape=jax.ShapeDtypeStruct((N * H, CoutW), jnp.float32),
        in_specs=[
            pl.BlockSpec(memory_space=vmem),   # image
            pl.BlockSpec(memory_space=vmem),   # mask
            pl.BlockSpec(memory_space=vmem),   # banded weights
            pl.BlockSpec(memory_space=vmem),   # bias (lane-broadcast)
        ],
        out_specs=pl.BlockSpec(memory_space=vmem),
        scratch_shapes=[
            pltpu.VMEM((N, H + 2, Cin * W), jnp.float32),      # padded slab
            pltpu.VMEM((N, H, KH * Cin * W), jnp.float32),     # stacked lhs
        ],
    )(image, mask, bw, bias_lane)

    # lane-dense (N*H, Cout*W) slab -> NCHW (cheap layout plumbing).
    out = out_flat.reshape(N, H, Cout, W)
    return jnp.transpose(out, (0, 2, 1, 3))


def reference_forward(image, mask, weight, bias):
    """Pure-JAX reference (matches PyTorch Conv2d(4,8,3,padding=1) + ReLU)."""
    x = jnp.concatenate([image, mask], axis=1).astype(jnp.float32)
    y = jax.lax.conv_general_dilated(
        x, weight.astype(jnp.float32),
        window_strides=(1, 1), padding=((1, 1), (1, 1)),
        dimension_numbers=("NCHW", "OIHW", "NCHW"))
    y = y + bias.reshape(1, -1, 1, 1)
    return jnp.maximum(y, 0.0)


if __name__ == "__main__":
    key = jax.random.PRNGKey(0)
    k_img, k_msk, k_w, k_b = jax.random.split(key, 4)

    N, C_img, C_msk, H, W = 2, 3, 1, 16, 16
    Cin, Cout = C_img + C_msk, 8

    image = jax.random.normal(k_img, (N, C_img, H, W), dtype=jnp.float32)
    mask = jax.random.normal(k_msk, (N, C_msk, H, W), dtype=jnp.float32)

    # Deterministic parameter init (Kaiming-uniform-like scale).
    fan_in = Cin * KH * KW
    bound = 1.0 / jnp.sqrt(fan_in)
    weight = jax.random.uniform(k_w, (Cout, Cin, KH, KW),
                                minval=-bound, maxval=bound,
                                dtype=jnp.float32)
    bias = jax.random.uniform(k_b, (Cout,), minval=-bound, maxval=bound,
                              dtype=jnp.float32)

    # Built once, reused across every forward call (per performance review).
    bw, bias_lane = prepare_encoder_params(weight, bias, W)
    bw = jax.block_until_ready(bw)

    out = jax.block_until_ready(
        basic_encoder_forward(image, mask, bw, bias_lane))
    ref = jax.block_until_ready(reference_forward(image, mask, weight, bias))

    assert out.shape == (N, Cout, H, W), out.shape
    assert jnp.allclose(out, ref, atol=1e-4, rtol=1e-4), \
        float(jnp.max(jnp.abs(out - ref)))
    print("KERNEL_OK")
</pallas_src>

<mosaic_0001>
module attributes {stable_mosaic.version = 11 : i64} {
  func.func @_fused_conv_relu_kernel(%arg0: memref<2x3x16x16xf32, #tpu.memory_space<vmem>>, %arg1: memref<2x1x16x16xf32, #tpu.memory_space<vmem>>, %arg2: memref<192x128xf32, #tpu.memory_space<vmem>>, %arg3: memref<1x128xf32, #tpu.memory_space<vmem>>, %arg4: memref<32x128xf32, #tpu.memory_space<vmem>>, %arg5: memref<2x18x64xf32, #tpu.memory_space<vmem>>, %arg6: memref<2x16x192xf32, #tpu.memory_space<vmem>>) attributes {dimension_semantics = [], scalar_prefetch = 0 : i64, scratch_operands = 2 : i64, tpu.core_type = #tpu.core_type<tc>} {
    %cst = arith.constant 0.000000e+00 : f32
    %0 = vector.broadcast %cst : f32 to vector<2x18x64xf32>
    %c0 = arith.constant 0 : index
    %c0_0 = arith.constant 0 : index
    %c0_1 = arith.constant 0 : index
    %1 = vector.load %arg5[%c0, %c0_0, %c0_1] : memref<2x18x64xf32, #tpu.memory_space<vmem>>, vector<2x18x64xf32>
    tpu.vector_store %arg5[%c0, %c0_0, %c0_1], %0 {strides = array<i32>} : memref<2x18x64xf32, #tpu.memory_space<vmem>>, vector<2x18x64xf32>,
    %c0_2 = arith.constant 0 : index
    %c0_3 = arith.constant 0 : index
    %c0_4 = arith.constant 0 : index
    %c0_5 = arith.constant 0 : index
    %2 = vector.load %arg0[%c0_2, %c0_3, %c0_4, %c0_5] : memref<2x3x16x16xf32, #tpu.memory_space<vmem>>, vector<2x3x16x16xf32>
    %c0_6 = arith.constant 0 : index
    %c0_7 = arith.constant 0 : index
    %c0_8 = arith.constant 0 : index
    %c0_9 = arith.constant 0 : index
    %3 = vector.load %arg1[%c0_6, %c0_7, %c0_8, %c0_9] : memref<2x1x16x16xf32, #tpu.memory_space<vmem>>, vector<2x1x16x16xf32>
    %4 = vector.extract_strided_slice %2 {offsets = [0, 0, 0, 0], sizes = [2, 1, 16, 16], strides = [1, 1, 1, 1]} : vector<2x3x16x16xf32> to vector<2x1x16x16xf32>
    %5 = vector.shape_cast %4 : vector<2x1x16x16xf32> to vector<2x16x16xf32>
    %c0_10 = arith.constant 0 : index
    %c1 = arith.constant 1 : index
    %c0_11 = arith.constant 0 : index
    %6 = vector.load %arg5[%c0_10, %c1, %c0_11] : memref<2x18x64xf32, #tpu.memory_space<vmem>>, vector<2x16x16xf32>
    tpu.vector_store %arg5[%c0_10, %c1, %c0_11], %5 {strides = array<i32>} : memref<2x18x64xf32, #tpu.memory_space<vmem>>, vector<2x16x16xf32>,
    %7 = vector.extract_strided_slice %2 {offsets = [0, 1, 0, 0], sizes = [2, 1, 16, 16], strides = [1, 1, 1, 1]} : vector<2x3x16x16xf32> to vector<2x1x16x16xf32>
    %8 = vector.shape_cast %7 : vector<2x1x16x16xf32> to vector<2x16x16xf32>
    %c0_12 = arith.constant 0 : index
    %c1_13 = arith.constant 1 : index
    %c16 = arith.constant 16 : index
    %9 = vector.load %arg5[%c0_12, %c1_13, %c16] : memref<2x18x64xf32, #tpu.memory_space<vmem>>, vector<2x16x16xf32>
    tpu.vector_store %arg5[%c0_12, %c1_13, %c16], %8 {strides = array<i32>} : memref<2x18x64xf32, #tpu.memory_space<vmem>>, vector<2x16x16xf32>,
    %10 = vector.extract_strided_slice %2 {offsets = [0, 2, 0, 0], sizes = [2, 1, 16, 16], strides = [1, 1, 1, 1]} : vector<2x3x16x16xf32> to vector<2x1x16x16xf32>
    %11 = vector.shape_cast %10 : vector<2x1x16x16xf32> to vector<2x16x16xf32>
    %c0_14 = arith.constant 0 : index
    %c1_15 = arith.constant 1 : index
    %c32 = arith.constant 32 : index
    %12 = vector.load %arg5[%c0_14, %c1_15, %c32] : memref<2x18x64xf32, #tpu.memory_space<vmem>>, vector<2x16x16xf32>
    tpu.vector_store %arg5[%c0_14, %c1_15, %c32], %11 {strides = array<i32>} : memref<2x18x64xf32, #tpu.memory_space<vmem>>, vector<2x16x16xf32>,
    %13 = vector.shape_cast %3 : vector<2x1x16x16xf32> to vector<2x16x16xf32>
    %c0_16 = arith.constant 0 : index
    %c1_17 = arith.constant 1 : index
    %c48 = arith.constant 48 : index
    %14 = vector.load %arg5[%c0_16, %c1_17, %c48] : memref<2x18x64xf32, #tpu.memory_space<vmem>>, vector<2x16x16xf32>
    tpu.vector_store %arg5[%c0_16, %c1_17, %c48], %13 {strides = array<i32>} : memref<2x18x64xf32, #tpu.memory_space<vmem>>, vector<2x16x16xf32>,
    %c0_18 = arith.constant 0 : index
    %c0_19 = arith.constant 0 : index
    %c0_20 = arith.constant 0 : index
    %15 = vector.load %arg5[%c0_18, %c0_19, %c0_20] : memref<2x18x64xf32, #tpu.memory_space<vmem>>, vector<2x16x64xf32>
    %c0_21 = arith.constant 0 : index
    %c0_22 = arith.constant 0 : index
    %c0_23 = arith.constant 0 : index
    %16 = vector.load %arg6[%c0_21, %c0_22, %c0_23] : memref<2x16x192xf32, #tpu.memory_space<vmem>>, vector<2x16x64xf32>
    tpu.vector_store %arg6[%c0_21, %c0_22, %c0_23], %15 {strides = array<i32>} : memref<2x16x192xf32, #tpu.memory_space<vmem>>, vector<2x16x64xf32>,
    %c0_24 = arith.constant 0 : index
    %c1_25 = arith.constant 1 : index
    %c0_26 = arith.constant 0 : index
    %17 = vector.load %arg5[%c0_24, %c1_25, %c0_26] : memref<2x18x64xf32, #tpu.memory_space<vmem>>, vector<2x16x64xf32>
    %c0_27 = arith.constant 0 : index
    %c0_28 = arith.constant 0 : index
    %c64 = arith.constant 64 : index
    %18 = vector.load %arg6[%c0_27, %c0_28, %c64] : memref<2x16x192xf32, #tpu.memory_space<vmem>>, vector<2x16x64xf32>
    tpu.vector_store %arg6[%c0_27, %c0_28, %c64], %17 {strides = array<i32>} : memref<2x16x192xf32, #tpu.memory_space<vmem>>, vector<2x16x64xf32>,
    %c0_29 = arith.constant 0 : index
    %c2 = arith.constant 2 : index
    %c0_30 = arith.constant 0 : index
    %19 = vector.load %arg5[%c0_29, %c2, %c0_30] : memref<2x18x64xf32, #tpu.memory_space<vmem>>, vector<2x16x64xf32>
    %c0_31 = arith.constant 0 : index
    %c0_32 = arith.constant 0 : index
    %c128 = arith.constant 128 : index
    %20 = vector.load %arg6[%c0_31, %c0_32, %c128] : memref<2x16x192xf32, #tpu.memory_space<vmem>>, vector<2x16x64xf32>
    tpu.vector_store %arg6[%c0_31, %c0_32, %c128], %19 {strides = array<i32>} : memref<2x16x192xf32, #tpu.memory_space<vmem>>, vector<2x16x64xf32>,
    %c0_33 = arith.constant 0 : index
    %c0_34 = arith.constant 0 : index
    %c0_35 = arith.constant 0 : index
    %21 = vector.load %arg6[%c0_33, %c0_34, %c0_35] : memref<2x16x192xf32, #tpu.memory_space<vmem>>, vector<2x16x192xf32>
    %22 = vector.shape_cast %21 : vector<2x16x192xf32> to vector<32x192xf32>
    %c0_36 = arith.constant 0 : index
    %c0_37 = arith.constant 0 : index
    %23 = vector.load %arg2[%c0_36, %c0_37] : memref<192x128xf32, #tpu.memory_space<vmem>>, vector<192x128xf32>
    %cst_38 = arith.constant dense<0.000000e+00> : vector<32x128xf32>
    %24 = tpu.matmul %22, %23, %cst_38 {dimension_numbers = #tpu.dot_dimension_numbers<[1], [0], [0], [1], [0, 0, 1, 1], [], []>} : vector<32x192xf32>, vector<192x128xf32>, vector<32x128xf32> -> vector<32x128xf32>
    %c0_39 = arith.constant 0 : index
    %c0_40 = arith.constant 0 : index
    %25 = vector.load %arg3[%c0_39, %c0_40] : memref<1x128xf32, #tpu.memory_space<vmem>>, vector<1x128xf32>
    %26 = vector.broadcast %25 : vector<1x128xf32> to vector<32x128xf32>
    %27 = arith.addf %24, %26 : vector<32x128xf32>
    %cst_41 = arith.constant 0.000000e+00 : f32
    %28 = vector.broadcast %cst_41 : f32 to vector<32x128xf32>
    %29 = arith.maximumf %27, %28 : vector<32x128xf32>
    %c0_42 = arith.constant 0 : index
    %c0_43 = arith.constant 0 : index
    %30 = vector.load %arg4[%c0_42, %c0_43] : memref<32x128xf32, #tpu.memory_space<vmem>>, vector<32x128xf32>
    tpu.vector_store %arg4[%c0_42, %c0_43], %29 {strides = array<i32>} : memref<32x128xf32, #tpu.memory_space<vmem>>, vector<32x128xf32>,
    return
  }
}

</mosaic_0001>

<llo_original>
// kernel: basic_encoder_forward.1
$region0: #{basic_encoder_forward.1}
  #allocation0 [shape = 'u32[]', space=smem, size = 0x4, offset = 0x4, fixed_abs, tag = 'smem constant byte address 0x4 - core index']
  #allocation1 [shape = 'u32[72,128]{1,0:T(1,128)}', space=vmem, size = 0x9000, scoped, tag = 'internal scratch']
  #allocation2 [shape = 'f32[2,18,64]{2,1,0:T(8,128)}', space=vmem, size = 0x6000, scoped, tag = 'scratch operand']
  #allocation3 [shape = 'f32[2,16,192]{2,1,0:T(8,128)}', space=vmem, size = 0x8000, scoped, tag = 'scratch operand']
  %s0 = inlined_call_operand.hbm [shape: f32[2,3,16,16], index: 0, kind: input, shape index: {}]
  %s1 = inlined_call_operand.hbm [shape: f32[2,1,16,16], index: 1, kind: input, shape index: {}]
  %s2 = inlined_call_operand.hbm [shape: f32[192,128], index: 2, kind: input, shape index: {}]
  %s3 = inlined_call_operand.vmem [shape: f32[1,128], index: 3, kind: input, shape index: {}]
  %s4 = inlined_call_operand.vmem [shape: f32[32,128], index: 4, kind: output, shape index: {}]
  %s5 = sld [smem:[#allocation0]]
  $region38: #{basic_encoder_forward.1} parent=0
    _
  %s7 = ssub.s32 1, %s5
  %s8 = scalar_select 0, %s7, %s5
  $region1: #{basic_encoder_forward.1} parent=0
    #allocation4 [shape = 'u8[49152]{0}', space=vmem, size = 0xc000, scoped, tag = 'input window, operand 0, single buffered']
    #allocation5 [shape = 's32[1]{0}', space=sflag, size = 0x4, scoped, tag = 'scoped memory for basic_encoder_forward.1']
    #allocation6 [shape = 'u8[16384]{0}', space=vmem, size = 0x4000, scoped, tag = 'input window, operand 1, single buffered']
    #allocation7 [shape = 's32[1]{0}', space=sflag, size = 0x4, scoped, tag = 'scoped memory for basic_encoder_forward.1']
    #allocation8 [shape = 'u8[98304]{0}', space=vmem, size = 0x18000, scoped, tag = 'input window, operand 2, single buffered']
    %9 = vsyncpa [#allocation5], 0
    %10 = vsyncpa [#allocation7], 0
    // Predicated region
    $region2: #{basic_encoder_forward.1} parent=1 // pred_check
      _
    $region3: #{basic_encoder_forward.1} parent=1 // pred_check_branch
      %12 = sbr.rel (0) target = $region5
    $region4: #{basic_encoder_forward.1} parent=1 // pred_region
      %14 = vsyncadd [#allocation5], 0
      %s15 = sshll.u32 %s0, 4
      %s16 = int_to_ptr.hbm [resolvable:$true] %s15
      %s17 = sshll.u32 [#allocation4], 4
      %s18 = int_to_ptr.vmem [resolvable:$true] %s17
      %23 = dma.hbm_to_vmem [thread:$0]  %s16, 1536, %s18, [#allocation5], 128, 128, 8
    $region5: #{basic_encoder_forward.1} parent=1 // pred_fallthru
      _
    // Predicated region
    $region6: #{basic_encoder_forward.1} parent=1 // pred_check
      _
    $region7: #{basic_encoder_forward.1} parent=1 // pred_check_branch
      %25 = sbr.rel (0) target = $region9
    $region8: #{basic_encoder_forward.1} parent=1 // pred_region
      %27 = vsyncadd [#allocation7], 0
      %s28 = sshll.u32 %s1, 4
      %s29 = int_to_ptr.hbm [resolvable:$true] %s28
      %s30 = sshll.u32 [#allocation6], 4
      %s31 = int_to_ptr.vmem [resolvable:$true] %s30
      %36 = dma.hbm_to_vmem [thread:$0]  %s29, 512, %s31, [#allocation7], 128, 128, 8
    $region9: #{basic_encoder_forward.1} parent=1 // pred_fallthru
      _
    // Predicated region
    $region10: #{basic_encoder_forward.1} parent=1 // pred_check
      _
    $region11: #{basic_encoder_forward.1} parent=1 // pred_check_branch
      %38 = sbr.rel (0) target = $region13
    $region12: #{basic_encoder_forward.1} parent=1 // pred_region
      %40 = vsyncadd [#allocation7], 0
      %s41 = sshll.u32 %s2, 4
      %s42 = int_to_ptr.hbm [resolvable:$true] %s41
      %s43 = sshll.u32 [#allocation8], 4
      %s44 = int_to_ptr.vmem [resolvable:$true] %s43
      %49 = dma.hbm_to_vmem [thread:$0]  %s42, 3072, %s44, [#allocation7], 128, 128, 8
    $region13: #{basic_encoder_forward.1} parent=1 // pred_fallthru
      _
    // Predicated region
    $region14: #{basic_encoder_forward.1} parent=1 // pred_check
      _
    $region15: #{basic_encoder_forward.1} parent=1 // pred_check_branch
      %51 = sbr.rel (0) target = $region17
    $region16: #{basic_encoder_forward.1} parent=1 // pred_region
      _
    $region17: #{basic_encoder_forward.1} parent=1 // pred_fallthru
      _
    // Predicated region
    $region18: #{basic_encoder_forward.1} parent=1 // pred_check
      _
    $region19: #{basic_encoder_forward.1} parent=1 // pred_check_branch
      %53 = sbr.rel (0) target = $region21
    $region20: #{basic_encoder_forward.1} parent=1 // pred_region
      %55 = dma.done [#allocation5], 1536
    $region21: #{basic_encoder_forward.1} parent=1 // pred_fallthru
      _
    // Predicated region
    $region22: #{basic_encoder_forward.1} parent=1 // pred_check
      _
    $region23: #{basic_encoder_forward.1} parent=1 // pred_check_branch
      %57 = sbr.rel (0) target = $region25
    $region24: #{basic_encoder_forward.1} parent=1 // pred_region
      %59 = dma.done [#allocation7], 512
    $region25: #{basic_encoder_forward.1} parent=1 // pred_fallthru
      _
    // Predicated region
    $region26: #{basic_encoder_forward.1} parent=1 // pred_check
      _
    $region27: #{basic_encoder_forward.1} parent=1 // pred_check_branch
      %61 = sbr.rel (0) target = $region29
    $region28: #{basic_encoder_forward.1} parent=1 // pred_region
      %63 = dma.done [#allocation7], 3072
    $region29: #{basic_encoder_forward.1} parent=1 // pred_fallthru
      _
    %vm64 = vcmask 523264
    %65 = vst.msk [vmem:[#allocation2] sm:$0xff] %vm64, 0.0
    %66 = vst.msk [vmem:[#allocation2 + $0x8] sm:$0xff] %vm64, 0.0
    %vm67 = vcmask 517120
    %68 = vst.msk [vmem:[#allocation2 + $0x10] sm:$0x3] %vm67, 0.0
    %69 = vst.msk [vmem:[#allocation2 + $0x18] sm:$0xff] %vm64, 0.0
    %70 = vst.msk [vmem:[#allocation2 + $0x20] sm:$0xff] %vm64, 0.0
    %71 = vst.msk [vmem:[#allocation2 + $0x28] sm:$0x3] %vm67, 0.0
    %v72 = vld [vmem:[#allocation4] sm:$0xff]
    %v73 = vld [vmem:[#allocation4 + $0x8] sm:$0xff]
    %v74 = vld [vmem:[#allocation4 + $0x10] sm:$0xff]
    %v75 = vld [vmem:[#allocation4 + $0x18] sm:$0xff]
    %v76 = vld [vmem:[#allocation4 + $0x20] sm:$0xff]
    %v77 = vld [vmem:[#allocation4 + $0x28] sm:$0xff]
    %v78 = vld [vmem:[#allocation4 + $0x30] sm:$0xff]
    %v79 = vld [vmem:[#allocation4 + $0x38] sm:$0xff]
    %v80 = vld [vmem:[#allocation4 + $0x40] sm:$0xff]
    %v81 = vld [vmem:[#allocation4 + $0x48] sm:$0xff]
    %v82 = vld [vmem:[#allocation4 + $0x50] sm:$0xff]
    %v83 = vld [vmem:[#allocation4 + $0x58] sm:$0xff]
    %v84 = vld [vmem:[#allocation6] sm:$0xff]
    %v85 = vld [vmem:[#allocation6 + $0x8] sm:$0xff]
    %v86 = vld [vmem:[#allocation6 + $0x10] sm:$0xff]
    %v87 = vld [vmem:[#allocation6 + $0x18] sm:$0xff]
    %vm88 = vcmask 130048
    %89 = vst.msk [vmem:[#allocation2 + $0x1] sm:$0xff] %vm88, %v72
    %90 = vst.msk [vmem:[#allocation2 + $0x9] sm:$0xff] %vm88, %v73
    %91 = vst.msk [vmem:[#allocation2 + $0x19] sm:$0xff] %vm88, %v78
    %92 = vst.msk [vmem:[#allocation2 + $0x21] sm:$0xff] %vm88, %v79
    %97 = vrot.lane.b32.xlu0 %v74, 16
    %v98 = vpop.permute.xlu0 %97
    %99 = vrot.lane.b32.xlu0 %v75, 16
    %v100 = vpop.permute.xlu0 %99
    %101 = vrot.lane.b32.xlu0 %v80, 16
    %v102 = vpop.permute.xlu0 %101
    %103 = vrot.lane.b32.xlu0 %v81, 16
    %v104 = vpop.permute.xlu0 %103
    %vm109 = vcmask 261248
    %110 = vst.msk [vmem:[#allocation2 + $0x1] sm:$0xff] %vm109, %v98
    %111 = vst.msk [vmem:[#allocation2 + $0x9] sm:$0xff] %vm109, %v100
    %112 = vst.msk [vmem:[#allocation2 + $0x19] sm:$0xff] %vm109, %v102
    %113 = vst.msk [vmem:[#allocation2 + $0x21] sm:$0xff] %vm109, %v104
    %118 = vrot.lane.b32.xlu0 %v76, 32
    %v119 = vpop.permute.xlu0 %118
    %120 = vrot.lane.b32.xlu0 %v77, 32
    %v121 = vpop.permute.xlu0 %120
    %122 = vrot.lane.b32.xlu0 %v82, 32
    %v123 = vpop.permute.xlu0 %122
    %124 = vrot.lane.b32.xlu0 %v83, 32
    %v125 = vpop.permute.xlu0 %124
    %vm130 = vcmask 392448
    %131 = vst.msk [vmem:[#allocation2 + $0x1] sm:$0xff] %vm130, %v119
    %132 = vst.msk [vmem:[#allocation2 + $0x9] sm:$0xff] %vm130, %v121
    %133 = vst.msk [vmem:[#allocation2 + $0x19] sm:$0xff] %vm130, %v123
    %134 = vst.msk [vmem:[#allocation2 + $0x21] sm:$0xff] %vm130, %v125
    %139 = vrot.lane.b32.xlu0 %v84, 48
    %v140 = vpop.permute.xlu0 %139
    %141 = vrot.lane.b32.xlu0 %v85, 48
    %v142 = vpop.permute.xlu0 %141
    %143 = vrot.lane.b32.xlu0 %v86, 48
    %v144 = vpop.permute.xlu0 %143
    %145 = vrot.lane.b32.xlu0 %v87, 48
    %v146 = vpop.permute.xlu0 %145
    %vm151 = vcmask 523648
    %152 = vst.msk [vmem:[#allocation2 + $0x1] sm:$0xff] %vm151, %v140
    %153 = vst.msk [vmem:[#allocation2 + $0x9] sm:$0xff] %vm151, %v142
    %154 = vst.msk [vmem:[#allocation2 + $0x19] sm:$0xff] %vm151, %v144
    %155 = vst.msk [vmem:[#allocation2 + $0x21] sm:$0xff] %vm151, %v146
    %v156 = vld [vmem:[#allocation2] sm:$0xff]
    %v157 = vld [vmem:[#allocation2 + $0x8] sm:$0xff]
    %v158 = vld [vmem:[#allocation2 + $0x18] sm:$0xff]
    %v159 = vld [vmem:[#allocation2 + $0x20] sm:$0xff]
    %160 = vst.msk [vmem:[#allocation3] sm:$0xff] %vm64, %v156
    %161 = vst.msk [vmem:[#allocation3 + $0x10] sm:$0xff] %vm64, %v157
    %162 = vst.msk [vmem:[#allocation3 + $0x20] sm:$0xff] %vm64, %v158
    %163 = vst.msk [vmem:[#allocation3 + $0x30] sm:$0xff] %vm64, %v159
    %v164 = vld [vmem:[#allocation2 + $0x1] sm:$0xff]
    %v165 = vld [vmem:[#allocation2 + $0x9] sm:$0xff]
    %v166 = vld [vmem:[#allocation2 + $0x19] sm:$0xff]
    %v167 = vld [vmem:[#allocation2 + $0x21] sm:$0xff]
    %172 = vrot.lane.b32.xlu0 %v164, 64
    %v173 = vpop.permute.xlu0 %172
    %174 = vrot.lane.b32.xlu0 %v165, 64
    %v175 = vpop.permute.xlu0 %174
    %176 = vrot.lane.b32.xlu0 %v166, 64
    %v177 = vpop.permute.xlu0 %176
    %178 = vrot.lane.b32.xlu0 %v167, 64
    %v179 = vpop.permute.xlu0 %178
    %vm184 = vcmask 1048064
    %185 = vst.msk [vmem:[#allocation3] sm:$0xff] %vm184, %v173
    %186 = vst.msk [vmem:[#allocation3 + $0x10] sm:$0xff] %vm184, %v175
    %187 = vst.msk [vmem:[#allocation3 + $0x20] sm:$0xff] %vm184, %v177
    %188 = vst.msk [vmem:[#allocation3 + $0x30] sm:$0xff] %vm184, %v179
    %v189 = vld [vmem:[#allocation2 + $0x2] sm:$0xff]
    %v190 = vld [vmem:[#allocation2 + $0xa] sm:$0xff]
    %v191 = vld [vmem:[#allocation2 + $0x1a] sm:$0xff]
    %v192 = vld [vmem:[#allocation2 + $0x22] sm:$0xff]
    %193 = vst.msk [vmem:[#allocation3 + $0x8] sm:$0xff] %vm64, %v189
    %194 = vst.msk [vmem:[#allocation3 + $0x18] sm:$0xff] %vm64, %v190
    %195 = vst.msk [vmem:[#allocation3 + $0x28] sm:$0xff] %vm64, %v191
    %196 = vst.msk [vmem:[#allocation3 + $0x38] sm:$0xff] %vm64, %v192
    %v197 = vld [vmem:[#allocation3] sm:$0xff]
    %v198 = vld [vmem:[#allocation3 + $0x8] sm:$0xff]
    %v199 = vld [vmem:[#allocation3 + $0x10] sm:$0xff]
    %v200 = vld [vmem:[#allocation3 + $0x18] sm:$0xff]
    %v201 = vld [vmem:[#allocation3 + $0x20] sm:$0xff]
    %v202 = vld [vmem:[#allocation3 + $0x28] sm:$0xff]
    %v203 = vld [vmem:[#allocation3 + $0x30] sm:$0xff]
    %v204 = vld [vmem:[#allocation3 + $0x38] sm:$0xff]
    %v205 = vld [vmem:[#allocation8] sm:$0xff]
    %v206 = vld [vmem:[#allocation8 + $0x8] sm:$0xff]
    %v207 = vld [vmem:[#allocation8 + $0x10] sm:$0xff]
    %v208 = vld [vmem:[#allocation8 + $0x18] sm:$0xff]
    %v209 = vld [vmem:[#allocation8 + $0x20] sm:$0xff]
    %v210 = vld [vmem:[#allocation8 + $0x28] sm:$0xff]
    %v211 = vld [vmem:[#allocation8 + $0x30] sm:$0xff]
    %v212 = vld [vmem:[#allocation8 + $0x38] sm:$0xff]
    %v213 = vld [vmem:[#allocation8 + $0x40] sm:$0xff]
    %v214 = vld [vmem:[#allocation8 + $0x48] sm:$0xff]
    %v215 = vld [vmem:[#allocation8 + $0x50] sm:$0xff]
    %v216 = vld [vmem:[#allocation8 + $0x58] sm:$0xff]
    %v217 = vld [vmem:[#allocation8 + $0x60] sm:$0xff]
    %v218 = vld [vmem:[#allocation8 + $0x68] sm:$0xff]
    %v219 = vld [vmem:[#allocation8 + $0x70] sm:$0xff]
    %v220 = vld [vmem:[#allocation8 + $0x78] sm:$0xff]
    %v221 = vld [vmem:[#allocation8 + $0x80] sm:$0xff]
    %v222 = vld [vmem:[#allocation8 + $0x88] sm:$0xff]
    %v223 = vld [vmem:[#allocation8 + $0x90] sm:$0xff]
    %v224 = vld [vmem:[#allocation8 + $0x98] sm:$0xff]
    %v225 = vld [vmem:[#allocation8 + $0xa0] sm:$0xff]
    %v226 = vld [vmem:[#allocation8 + $0xa8] sm:$0xff]
    %v227 = vld [vmem:[#allocation8 + $0xb0] sm:$0xff]
    %v228 = vld [vmem:[#allocation8 + $0xb8] sm:$0xff]
    %v229 = vld [vmem:[%s3] sm:$0x1]
    %v231 = vperm.slane %v229, 0
    %v234 = vsel %vm64, %v198, 0
    %v237 = vsel %vm64, %v200, 0
    %v240 = vsel %vm64, %v202, 0
    %v243 = vsel %vm64, %v204, 0
    %245 = vmatpush.msra.mxu0 %v220
    %246 = vmatpush.msra.mxu0 %v219
    %247 = vmatpush.msra.mxu0 %v218
    %248 = vmatpush.msra.mxu0 %v217
    %249 = vmatpush.msra.mxu0 %v216
    %250 = vmatpush.msra.mxu0 %v215
    %251 = vmatpush.msra.mxu0 %v214
    %252 = vmatpush.msra.mxu0 %v213
    %253 = vmatpush.msra.mxu0 %v212
    %254 = vmatpush.msra.mxu0 %v211
    %255 = vmatpush.msra.mxu0 %v210
    %256 = vmatpush.msra.mxu0 %v209
    %257 = vmatpush.msra.mxu0 %v208
    %258 = vmatpush.msra.mxu0 %v207
    %259 = vmatpush.msra.mxu0 %v206
    %260 = vmatpush.msra.mxu0 %v205
    %261 = vmatmul.f32.gmra.mxu0 %v197
    %v262 = vpop.f32.mrf.mxu0
    %v263 = vadd.f32 %v231, %v262
    %264 = vmatmul.f32.gmra.mxu0 %v199
    %v265 = vpop.f32.mrf.mxu0
    %v266 = vadd.f32 %v231, %v265
    %267 = vmatmul.f32.gmra.mxu0 %v201
    %v268 = vpop.f32.mrf.mxu0
    %v269 = vadd.f32 %v231, %v268
    %270 = vmatmul.f32.gmra.mxu0 %v203
    %v271 = vpop.f32.mrf.mxu0
    %v272 = vadd.f32 %v231, %v271
    %273 = vdwg.mxu0
    %274 = vmatpush.msra.mxu0 0.0
    %275 = vmatpush.msra.mxu0 0.0
    %276 = vmatpush.msra.mxu0 0.0
    %277 = vmatpush.msra.mxu0 0.0
    %278 = vmatpush.msra.mxu0 0.0
    %279 = vmatpush.msra.mxu0 0.0
    %280 = vmatpush.msra.mxu0 0.0
    %281 = vmatpush.msra.mxu0 0.0
    %282 = vmatpush.msra.mxu0 %v228
    %283 = vmatpush.msra.mxu0 %v227
    %284 = vmatpush.msra.mxu0 %v226
    %285 = vmatpush.msra.mxu0 %v225
    %286 = vmatpush.msra.mxu0 %v224
    %287 = vmatpush.msra.mxu0 %v223
    %288 = vmatpush.msra.mxu0 %v222
    %289 = vmatpush.msra.mxu0 %v221
    %290 = vmatmul.f32.gmra.mxu0 %v234
    %v291 = vpop.f32.mrf.mxu0
    %v292 = vadd.f32 %v263, %v291
    %293 = vmatmul.f32.gmra.mxu0 %v237
    %v294 = vpop.f32.mrf.mxu0
    %v295 = vadd.f32 %v266, %v294
    %296 = vmatmul.f32.gmra.mxu0 %v240
    %v297 = vpop.f32.mrf.mxu0
    %v298 = vadd.f32 %v269, %v297
    %299 = vmatmul.f32.gmra.mxu0 %v243
    %v300 = vpop.f32.mrf.mxu0
    %v301 = vadd.f32 %v272, %v300
    %302 = vdwg.mxu0
    %v303 = vmax.f32 %v292, 0.0
    %v304 = vmax.f32 %v295, 0.0
    %v305 = vmax.f32 %v298, 0.0
    %v306 = vmax.f32 %v301, 0.0
    %307 = vst [vmem:[%s4] sm:$0xff] %v303
    %308 = vst [vmem:[%s4 + $0x8] sm:$0xff] %v304
    %309 = vst [vmem:[%s4 + $0x10] sm:$0xff] %v305
    %310 = vst [vmem:[%s4 + $0x18] sm:$0xff] %v306
    // Predicated region
    $region30: #{basic_encoder_forward.1} parent=1 // pred_check
      _
    $region31: #{basic_encoder_forward.1} parent=1 // pred_check_branch
      %312 = sbr.rel (0) target = $region33
    $region32: #{basic_encoder_forward.1} parent=1 // pred_region
      _
    $region33: #{basic_encoder_forward.1} parent=1 // pred_fallthru
      _
    // Predicated region
    $region34: #{basic_encoder_forward.1} parent=1 // pred_check
      _
    $region35: #{basic_encoder_forward.1} parent=1 // pred_check_branch
      %314 = sbr.rel (0) target = $region37
    $region36: #{basic_encoder_forward.1} parent=1 // pred_region
      _
    $region37: #{basic_encoder_forward.1} parent=1 // pred_fallthru
      _
    %315 = vsyncpa [#allocation5], 1
    %316 = vsyncpa [#allocation7], 1

</llo_original>
